<compile_context>
chip_gen: v5e
topology: v5e:2x2
jax: 0.10.0
libtpu: 0.0.40
codegen_flags: <defaults>
</compile_context>

<pallas_src>
import functools

import jax
import jax.numpy as jnp
from jax.experimental import pallas as pl
from jax.experimental.pallas import tpu as pltpu

# ---- model configuration (small, consistent with the module) ---------------
J = 8                        # number of locations (bmm batch dim, softmax width)
NUM_FEATURES = 16            # per-location feature width
JF = J * NUM_FEATURES        # 128: flattened feature width == one full lane tile
ETA = 10.0                   # eta_matrix = ETA * I_J (deterministic stand-in for the global eta_matrix)


# =============================================================================
# Kernel: SB independent instances (shared weights) per grid step.
# =============================================================================
def idprobnet_kernel(x_ref, w0_ref, w1_ref, wl_ref, cs1_ref, csl_ref, etaT_ref, out_ref):
    """x_ref: (SB, B, J*F) flattened inputs; out_ref: (SB, B*J) lane-dense slab."""
    sb, b, jf = x_ref.shape
    j = etaT_ref.shape[-1]
    n = b * jf                                        # per-instance element count (1024)

    x2 = x_ref[...].reshape(sb * b, jf)               # (SB*8, 128): tall MXU LHS

    # ---- hidden layer 1: MXU matmul + relu; one-pass per-sample BN stats ------
    h1 = jnp.maximum(
        jnp.dot(x2, w0_ref[...], preferred_element_type=jnp.float32), 0.0)      # (SB*8, 128)
    h1_3 = h1.reshape(sb, b, jf)                      # layout-preserving (b == sublane tile)
    s1 = jnp.sum(h1_3, axis=(1, 2), keepdims=True)    # (SB,1,1)
    ss1 = jnp.sum(h1_3 * h1_3, axis=(1, 2), keepdims=True)
    mean1 = s1 / n
    var1 = (ss1 - s1 * s1 / n) / (n - 1)              # torch.var(): unbiased (n-1)
    inv1 = jax.lax.rsqrt(var1)                        # var==0 -> NaN, same hazard as the torch code

    # ---- hidden layer 2: BN affine folded into the matmul ---------------------
    #   bn(h1) @ W1 = inv1 * (h1 @ W1) - (mean1*inv1) * colsum(W1)
    t2 = jnp.dot(h1, w1_ref[...], preferred_element_type=jnp.float32).reshape(sb, b, jf)
    h2_3 = jnp.maximum(inv1 * t2 - (mean1 * inv1) * cs1_ref[...], 0.0)           # (SB, 8, 128)
    s2 = jnp.sum(h2_3, axis=(1, 2), keepdims=True)
    ss2 = jnp.sum(h2_3 * h2_3, axis=(1, 2), keepdims=True)
    mean2 = s2 / n
    var2 = (ss2 - s2 * s2 / n) / (n - 1)
    inv2 = jax.lax.rsqrt(var2)

    # ---- final projection (MXU) with BN folded; transposed (s, b, j) layout ---
    u = jnp.dot(h2_3.reshape(sb * b, jf), wl_ref[...],
                preferred_element_type=jnp.float32).reshape(sb, b, j)
    yT = inv2 * u - (mean2 * inv2) * csl_ref[...] + etaT_ref[...]   # yT[s,b,j] == y[s,j,b]

    # ---- batched, numerically stable softmax over the b (sublane) axis --------
    yT = yT - jnp.max(yT, axis=1, keepdims=True)
    e = jnp.exp(yT)
    inv = pl.reciprocal(jnp.sum(e, axis=1, keepdims=True), approx=False)  # exact: rows must sum to 1
    p = e * inv                                                           # (SB, 8, 8) transposed result

    # lane-dense store: per-sample 8x8 flattened along lanes -> one (SB, 64) slab
    out_ref[...] = p.reshape(sb, b * j).astype(out_ref.dtype)


# =============================================================================
# Wrapper-side restructuring (cheap XLA glue, fused under jit)
# =============================================================================
def _block_diag(w):
    """(J, F, F) -> (J*F, J*F) block-diagonal: block j on the diagonal is w[j]."""
    j, f, g = w.shape
    eye = jnp.eye(j, dtype=w.dtype)
    return jnp.einsum("jfg,jk->jfkg", w, eye).reshape(j * f, j * g)


def _structured_last(w_last):
    """(J, F, 1) -> (J*F, J): column j is nonzero only in feature block j."""
    wl = w_last[:, :, 0]                                              # (J, F)
    j, f = wl.shape
    eye = jnp.eye(j, dtype=wl.dtype)
    return (wl[:, :, None] * eye[:, None, :]).reshape(j * f, j)


def _choose_sb(S, cap=256):
    """Samples per grid step: multiple of 8 (or == S when S<=8), <= cap, and
    >= 2 grid steps when S allows it (v7x has 2 TensorCores). Returns (sb, S_pad)."""
    if S <= 8:
        return S, S                                  # one step; block == full array
    sb = min(cap, (S // 2 // 8) * 8)
    sb = max(sb, 8)
    S_pad = ((S + sb - 1) // sb) * sb                # pad awkward S -> never sb=1 cliffs
    return sb, S_pad


@functools.partial(jax.jit, static_argnames=("samples_per_block",))
def idprobnet_forward_batched(inp_batch, w0, w1, w_last, eta_matrix,
                              samples_per_block=None):
    """S independent instances (shared weights) in one pallas_call."""
    S, j, b, f = inp_batch.shape
    jf = j * f
    if samples_per_block is None:
        sb, S_pad = _choose_sb(S)
    else:
        sb = int(samples_per_block)
        S_pad = ((S + sb - 1) // sb) * sb
    assert sb >= 1 and S_pad % sb == 0

    if S_pad != S:                                    # pad with edge samples; sliced off below
        inp_batch = jnp.pad(inp_batch, ((0, S_pad - S), (0, 0), (0, 0), (0, 0)), mode="edge")

    # (S, J, B, F) -> (S, B, J*F): x_flat[s, b, j*F + f] = inp[s, j, b, f]
    x_flat = jnp.transpose(inp_batch, (0, 2, 1, 3)).reshape(S_pad, b, jf)

    w0_bd = _block_diag(w0)                           # (128, 128)
    w1_bd = _block_diag(w1)                           # (128, 128)
    wl_st = _structured_last(w_last)                  # (128, 8)
    cs1 = jnp.sum(w1_bd, axis=0, keepdims=True)       # (1, 128)   BN-fold column sums
    csl = jnp.sum(wl_st, axis=0, keepdims=True)       # (1, 8)
    etaT = jnp.transpose(eta_matrix)                  # kernel computes in transposed layout

    out_flat = pl.pallas_call(
        idprobnet_kernel,
        out_shape=jax.ShapeDtypeStruct((S_pad, b * j), jnp.float32),
        grid=(S_pad // sb,),
        in_specs=[
            pl.BlockSpec((sb, b, jf), lambda i: (i, 0, 0)),   # x
            pl.BlockSpec((jf, jf), lambda i: (0, 0)),          # w0 block-diag
            pl.BlockSpec((jf, jf), lambda i: (0, 0)),          # w1 block-diag
            pl.BlockSpec((jf, j), lambda i: (0, 0)),           # w_last structured
            pl.BlockSpec((1, jf), lambda i: (0, 0)),            # colsum(W1)
            pl.BlockSpec((1, j), lambda i: (0, 0)),             # colsum(WL)
            pl.BlockSpec((j, j), lambda i: (0, 0)),              # eta^T
        ],
        out_specs=pl.BlockSpec((sb, b * j), lambda i: (i, 0)),
        compiler_params=pltpu.CompilerParams(dimension_semantics=("parallel",)),
    )(x_flat, w0_bd, w1_bd, wl_st, cs1, csl, etaT)

    # (S, 64) -> (S, b, j) transposed layout -> (S, j, b) == (S, J, J)
    out = out_flat[:S].reshape(S, b, j)
    return jnp.transpose(out, (0, 2, 1))


@jax.jit
def idprobnet_forward(inp, w0, w1, w_last, eta_matrix):
    """Single instance, routed through the batched entry (per review: don't invest in a
    separate single-instance kernel; wall time there is pure launch overhead)."""
    return idprobnet_forward_batched(inp[None], w0, w1, w_last, eta_matrix)[0]


# =============================================================================
# Pure-JAX reference (mirrors the torch code) and demo
# =============================================================================
def idprobnet_reference(inp, w0, w1, w_last, eta_matrix):
    x = inp
    for w in (w0, w1):
        h = jnp.maximum(jnp.einsum("jbf,jfg->jbg", x, w), 0.0)
        mean = jnp.mean(h)
        var = jnp.sum((h - mean) ** 2) / (h.size - 1)
        x = (h - mean) / jnp.sqrt(var)
    y = jnp.einsum("jbf,jf->jb", x, w_last[:, :, 0]) + eta_matrix   # == bmm(...).view(-1, J) since B == J
    return jax.nn.softmax(y, axis=1)


def make_params(key):
    """Deterministic stand-in for nn.init.normal_ on the ParameterList."""
    k0, k1, k2, k3 = jax.random.split(key, 4)
    w0 = jax.random.normal(k0, (J, NUM_FEATURES, NUM_FEATURES), jnp.float32)
    w1 = jax.random.normal(k1, (J, NUM_FEATURES, NUM_FEATURES), jnp.float32)
    w_last = jax.random.normal(k2, (J, NUM_FEATURES, 1), jnp.float32)
    inp = jax.random.normal(k3, (J, J, NUM_FEATURES), jnp.float32)
    return inp, w0, w1, w_last


if __name__ == "__main__":
    key = jax.random.PRNGKey(0)
    inp, w0, w1, w_last = make_params(key)
    eta_matrix = ETA * jnp.eye(J, dtype=jnp.float32)

    # ---- single-instance forward --------------------------------------------
    out = jax.block_until_ready(idprobnet_forward(inp, w0, w1, w_last, eta_matrix))
    ref = idprobnet_reference(inp, w0, w1, w_last, eta_matrix)
    assert out.shape == (J, J)
    assert bool(jnp.allclose(jnp.sum(out, axis=1), 1.0, atol=1e-4))  # rows of P^T sum to 1 (exact recip)
    assert bool(jnp.allclose(out, ref, atol=5e-3, rtol=5e-3))

    # ---- batched forward: S independent instances, shared weights ------------
    S = 16
    inp_b = jax.random.normal(jax.random.PRNGKey(1), (S, J, J, NUM_FEATURES), jnp.float32)
    inp_b = inp_b.at[0].set(inp)
    out_b = jax.block_until_ready(
        idprobnet_forward_batched(inp_b, w0, w1, w_last, eta_matrix))
    ref_b = jax.vmap(lambda x: idprobnet_reference(x, w0, w1, w_last, eta_matrix))(inp_b)
    assert out_b.shape == (S, J, J)
    assert bool(jnp.allclose(out_b, ref_b, atol=5e-3, rtol=5e-3))
    assert bool(jnp.allclose(out_b[0], out, atol=5e-3))

    # ---- awkward S (exercises the pad-and-slice guard against sb=1 cliffs) ----
    S2 = 9
    out_b2 = jax.block_until_ready(
        idprobnet_forward_batched(inp_b[:S2], w0, w1, w_last, eta_matrix))
    assert out_b2.shape == (S2, J, J)
    assert bool(jnp.allclose(out_b2, ref_b[:S2], atol=5e-3, rtol=5e-3))

    print("KERNEL_OK")
</pallas_src>

<mosaic_0001>
module attributes {stable_mosaic.version = 11 : i64} {
  func.func @idprobnet_kernel(%arg0: i32, %arg1: memref<1x8x128xf32, #tpu.memory_space<vmem>>, %arg2: memref<128x128xf32, #tpu.memory_space<vmem>>, %arg3: memref<128x128xf32, #tpu.memory_space<vmem>>, %arg4: memref<128x8xf32, #tpu.memory_space<vmem>>, %arg5: memref<1x128xf32, #tpu.memory_space<vmem>>, %arg6: memref<1x8xf32, #tpu.memory_space<vmem>>, %arg7: memref<8x8xf32, #tpu.memory_space<vmem>>, %arg8: memref<1x64xf32, #tpu.memory_space<vmem>>) attributes {dimension_semantics = [#tpu.dimension_semantics<parallel>], iteration_bounds = array<i64: 1>, scalar_prefetch = 0 : i64, scratch_operands = 0 : i64, tpu.core_type = #tpu.core_type<tc>, window_params = [{transform_indices = @transform_0, window_bounds = array<i64: 1, 8, 128>}, {pipeline_mode = #tpu.pipeline_mode<synchronous>, transform_indices = @transform_1, window_bounds = array<i64: 128, 128>}, {pipeline_mode = #tpu.pipeline_mode<synchronous>, transform_indices = @transform_2, window_bounds = array<i64: 128, 128>}, {pipeline_mode = #tpu.pipeline_mode<synchronous>, transform_indices = @transform_3, window_bounds = array<i64: 128, 8>}, {pipeline_mode = #tpu.pipeline_mode<synchronous>, transform_indices = @transform_4, window_bounds = array<i64: 1, 128>}, {pipeline_mode = #tpu.pipeline_mode<synchronous>, transform_indices = @transform_5, window_bounds = array<i64: 1, 8>}, {pipeline_mode = #tpu.pipeline_mode<synchronous>, transform_indices = @transform_6, window_bounds = array<i64: 8, 8>}, {transform_indices = @transform_7, window_bounds = array<i64: 1, 64>}]} {
    %c0 = arith.constant 0 : index
    %c0_0 = arith.constant 0 : index
    %c0_1 = arith.constant 0 : index
    %0 = vector.load %arg1[%c0, %c0_0, %c0_1] : memref<1x8x128xf32, #tpu.memory_space<vmem>>, vector<1x8x128xf32>
    %1 = vector.shape_cast %0 : vector<1x8x128xf32> to vector<8x128xf32>
    %c0_2 = arith.constant 0 : index
    %c0_3 = arith.constant 0 : index
    %2 = vector.load %arg2[%c0_2, %c0_3] : memref<128x128xf32, #tpu.memory_space<vmem>>, vector<128x128xf32>
    %cst = arith.constant dense<0.000000e+00> : vector<8x128xf32>
    %3 = tpu.matmul %1, %2, %cst {dimension_numbers = #tpu.dot_dimension_numbers<[1], [0], [0], [1], [0, 0, 1, 1], [], []>} : vector<8x128xf32>, vector<128x128xf32>, vector<8x128xf32> -> vector<8x128xf32>
    %cst_4 = arith.constant 0.000000e+00 : f32
    %4 = vector.broadcast %cst_4 : f32 to vector<8x128xf32>
    %5 = arith.maximumf %3, %4 : vector<8x128xf32>
    %6 = vector.shape_cast %5 : vector<8x128xf32> to vector<1x8x128xf32>
    %cst_5 = arith.constant dense<0.000000e+00> : vector<1xf32>
    %7 = vector.multi_reduction <add>, %6, %cst_5 [1, 2] : vector<1x8x128xf32> to vector<1xf32>
    %8 = vector.shape_cast %7 : vector<1xf32> to vector<1x1x1xf32>
    %9 = arith.mulf %6, %6 : vector<1x8x128xf32>
    %cst_6 = arith.constant dense<0.000000e+00> : vector<1xf32>
    %10 = vector.multi_reduction <add>, %9, %cst_6 [1, 2] : vector<1x8x128xf32> to vector<1xf32>
    %11 = vector.shape_cast %10 : vector<1xf32> to vector<1x1x1xf32>
    %cst_7 = arith.constant 1.024000e+03 : f32
    %12 = vector.broadcast %cst_7 : f32 to vector<1x1x1xf32>
    %13 = arith.divf %8, %12 : vector<1x1x1xf32>
    %14 = arith.mulf %8, %8 : vector<1x1x1xf32>
    %cst_8 = arith.constant 1.024000e+03 : f32
    %15 = vector.broadcast %cst_8 : f32 to vector<1x1x1xf32>
    %16 = arith.divf %14, %15 : vector<1x1x1xf32>
    %17 = arith.subf %11, %16 : vector<1x1x1xf32>
    %cst_9 = arith.constant 1.023000e+03 : f32
    %18 = vector.broadcast %cst_9 : f32 to vector<1x1x1xf32>
    %19 = arith.divf %17, %18 : vector<1x1x1xf32>
    %20 = math.rsqrt %19 : vector<1x1x1xf32>
    %c0_10 = arith.constant 0 : index
    %c0_11 = arith.constant 0 : index
    %21 = vector.load %arg3[%c0_10, %c0_11] : memref<128x128xf32, #tpu.memory_space<vmem>>, vector<128x128xf32>
    %cst_12 = arith.constant dense<0.000000e+00> : vector<8x128xf32>
    %22 = tpu.matmul %5, %21, %cst_12 {dimension_numbers = #tpu.dot_dimension_numbers<[1], [0], [0], [1], [0, 0, 1, 1], [], []>} : vector<8x128xf32>, vector<128x128xf32>, vector<8x128xf32> -> vector<8x128xf32>
    %23 = vector.shape_cast %22 : vector<8x128xf32> to vector<1x8x128xf32>
    %24 = vector.broadcast %20 : vector<1x1x1xf32> to vector<1x8x128xf32>
    %25 = arith.mulf %24, %23 : vector<1x8x128xf32>
    %26 = arith.mulf %13, %20 : vector<1x1x1xf32>
    %c0_13 = arith.constant 0 : index
    %c0_14 = arith.constant 0 : index
    %27 = vector.load %arg5[%c0_13, %c0_14] : memref<1x128xf32, #tpu.memory_space<vmem>>, vector<1x128xf32>
    %28 = vector.shape_cast %27 : vector<1x128xf32> to vector<1x1x128xf32>
    %29 = vector.broadcast %26 : vector<1x1x1xf32> to vector<1x1x128xf32>
    %30 = arith.mulf %29, %28 : vector<1x1x128xf32>
    %31 = vector.broadcast %30 : vector<1x1x128xf32> to vector<1x8x128xf32>
    %32 = arith.subf %25, %31 : vector<1x8x128xf32>
    %cst_15 = arith.constant 0.000000e+00 : f32
    %33 = vector.broadcast %cst_15 : f32 to vector<1x8x128xf32>
    %34 = arith.maximumf %32, %33 : vector<1x8x128xf32>
    %cst_16 = arith.constant dense<0.000000e+00> : vector<1xf32>
    %35 = vector.multi_reduction <add>, %34, %cst_16 [1, 2] : vector<1x8x128xf32> to vector<1xf32>
    %36 = vector.shape_cast %35 : vector<1xf32> to vector<1x1x1xf32>
    %37 = arith.mulf %34, %34 : vector<1x8x128xf32>
    %cst_17 = arith.constant dense<0.000000e+00> : vector<1xf32>
    %38 = vector.multi_reduction <add>, %37, %cst_17 [1, 2] : vector<1x8x128xf32> to vector<1xf32>
    %39 = vector.shape_cast %38 : vector<1xf32> to vector<1x1x1xf32>
    %cst_18 = arith.constant 1.024000e+03 : f32
    %40 = vector.broadcast %cst_18 : f32 to vector<1x1x1xf32>
    %41 = arith.divf %36, %40 : vector<1x1x1xf32>
    %42 = arith.mulf %36, %36 : vector<1x1x1xf32>
    %cst_19 = arith.constant 1.024000e+03 : f32
    %43 = vector.broadcast %cst_19 : f32 to vector<1x1x1xf32>
    %44 = arith.divf %42, %43 : vector<1x1x1xf32>
    %45 = arith.subf %39, %44 : vector<1x1x1xf32>
    %cst_20 = arith.constant 1.023000e+03 : f32
    %46 = vector.broadcast %cst_20 : f32 to vector<1x1x1xf32>
    %47 = arith.divf %45, %46 : vector<1x1x1xf32>
    %48 = math.rsqrt %47 : vector<1x1x1xf32>
    %49 = vector.shape_cast %34 : vector<1x8x128xf32> to vector<8x128xf32>
    %c0_21 = arith.constant 0 : index
    %c0_22 = arith.constant 0 : index
    %50 = vector.load %arg4[%c0_21, %c0_22] : memref<128x8xf32, #tpu.memory_space<vmem>>, vector<128x8xf32>
    %cst_23 = arith.constant dense<0.000000e+00> : vector<8x8xf32>
    %51 = tpu.matmul %49, %50, %cst_23 {dimension_numbers = #tpu.dot_dimension_numbers<[1], [0], [0], [1], [0, 0, 1, 1], [], []>} : vector<8x128xf32>, vector<128x8xf32>, vector<8x8xf32> -> vector<8x8xf32>
    %52 = vector.shape_cast %51 : vector<8x8xf32> to vector<1x8x8xf32>
    %53 = vector.broadcast %48 : vector<1x1x1xf32> to vector<1x8x8xf32>
    %54 = arith.mulf %53, %52 : vector<1x8x8xf32>
    %55 = arith.mulf %41, %48 : vector<1x1x1xf32>
    %c0_24 = arith.constant 0 : index
    %c0_25 = arith.constant 0 : index
    %56 = vector.load %arg6[%c0_24, %c0_25] : memref<1x8xf32, #tpu.memory_space<vmem>>, vector<1x8xf32>
    %57 = vector.shape_cast %56 : vector<1x8xf32> to vector<1x1x8xf32>
    %58 = vector.broadcast %55 : vector<1x1x1xf32> to vector<1x1x8xf32>
    %59 = arith.mulf %58, %57 : vector<1x1x8xf32>
    %60 = vector.broadcast %59 : vector<1x1x8xf32> to vector<1x8x8xf32>
    %61 = arith.subf %54, %60 : vector<1x8x8xf32>
    %c0_26 = arith.constant 0 : index
    %c0_27 = arith.constant 0 : index
    %62 = vector.load %arg7[%c0_26, %c0_27] : memref<8x8xf32, #tpu.memory_space<vmem>>, vector<8x8xf32>
    %63 = vector.shape_cast %62 : vector<8x8xf32> to vector<1x8x8xf32>
    %64 = arith.addf %61, %63 : vector<1x8x8xf32>
    %cst_28 = arith.constant dense<0xFF800000> : vector<1x8xf32>
    %65 = vector.multi_reduction <maximumf>, %64, %cst_28 [1] : vector<1x8x8xf32> to vector<1x8xf32>
    %66 = vector.shape_cast %65 : vector<1x8xf32> to vector<1x1x8xf32>
    %67 = vector.broadcast %66 : vector<1x1x8xf32> to vector<1x8x8xf32>
    %68 = arith.subf %64, %67 : vector<1x8x8xf32>
    %69 = math.exp %68 : vector<1x8x8xf32>
    %cst_29 = arith.constant dense<0.000000e+00> : vector<1x8xf32>
    %70 = vector.multi_reduction <add>, %69, %cst_29 [1] : vector<1x8x8xf32> to vector<1x8xf32>
    %71 = vector.shape_cast %70 : vector<1x8xf32> to vector<1x1x8xf32>
    %72 = tpu.reciprocal %71 : vector<1x1x8xf32> -> vector<1x1x8xf32>
    %73 = vector.broadcast %72 : vector<1x1x8xf32> to vector<1x8x8xf32>
    %74 = arith.mulf %69, %73 : vector<1x8x8xf32>
    %75 = vector.shape_cast %74 : vector<1x8x8xf32> to vector<1x64xf32>
    %c0_30 = arith.constant 0 : index
    %c0_31 = arith.constant 0 : index
    %76 = vector.load %arg8[%c0_30, %c0_31] : memref<1x64xf32, #tpu.memory_space<vmem>>, vector<1x64xf32>
    tpu.vector_store %arg8[%c0_30, %c0_31], %75 {strides = array<i32>} : memref<1x64xf32, #tpu.memory_space<vmem>>, vector<1x64xf32>,
    return
  }
  func.func @transform_0(%arg0: i32) -> (i32, i32, i32) {
    %c0_i32 = arith.constant 0 : i32
    %c0_i32_0 = arith.constant 0 : i32
    %c0_i32_1 = arith.constant 0 : i32
    return %arg0, %c0_i32, %c0_i32_0 : i32, i32, i32
  }
  func.func @transform_1(%arg0: i32) -> (i32, i32) {
    %c0_i32 = arith.constant 0 : i32
    %c0_i32_0 = arith.constant 0 : i32
    %c0_i32_1 = arith.constant 0 : i32
    return %c0_i32, %c0_i32_0 : i32, i32
  }
  func.func @transform_2(%arg0: i32) -> (i32, i32) {
    %c0_i32 = arith.constant 0 : i32
    %c0_i32_0 = arith.constant 0 : i32
    %c0_i32_1 = arith.constant 0 : i32
    return %c0_i32, %c0_i32_0 : i32, i32
  }
  func.func @transform_3(%arg0: i32) -> (i32, i32) {
    %c0_i32 = arith.constant 0 : i32
    %c0_i32_0 = arith.constant 0 : i32
    %c0_i32_1 = arith.constant 0 : i32
    return %c0_i32, %c0_i32_0 : i32, i32
  }
  func.func @transform_4(%arg0: i32) -> (i32, i32) {
    %c0_i32 = arith.constant 0 : i32
    %c0_i32_0 = arith.constant 0 : i32
    %c0_i32_1 = arith.constant 0 : i32
    return %c0_i32, %c0_i32_0 : i32, i32
  }
  func.func @transform_5(%arg0: i32) -> (i32, i32) {
    %c0_i32 = arith.constant 0 : i32
    %c0_i32_0 = arith.constant 0 : i32
    %c0_i32_1 = arith.constant 0 : i32
    return %c0_i32, %c0_i32_0 : i32, i32
  }
  func.func @transform_6(%arg0: i32) -> (i32, i32) {
    %c0_i32 = arith.constant 0 : i32
    %c0_i32_0 = arith.constant 0 : i32
    %c0_i32_1 = arith.constant 0 : i32
    return %c0_i32, %c0_i32_0 : i32, i32
  }
  func.func @transform_7(%arg0: i32) -> (i32, i32) {
    %c0_i32 = arith.constant 0 : i32
    %c0_i32_0 = arith.constant 0 : i32
    return %arg0, %c0_i32 : i32, i32
  }
}

</mosaic_0001>

<llo_original>
// kernel: idprobnet_forward_batched.1
$region0: #{idprobnet_forward_batched.1}
  #allocation0 [shape = 'u32[]', space=smem, size = 0x4, offset = 0x4, fixed_abs, tag = 'smem constant byte address 0x4 - core index']
  #allocation1 [shape = 'u32[72,128]{1,0:T(1,128)}', space=vmem, size = 0x9000, scoped, tag = 'internal scratch']
  %s0 = inlined_call_operand.vmem [shape: f32[1,8,128], index: 0, kind: input, shape index: {}]
  %s1 = inlined_call_operand.vmem [shape: f32[128,128], index: 1, kind: input, shape index: {}]
  %s2 = inlined_call_operand.vmem [shape: f32[128,128], index: 2, kind: input, shape index: {}]
  %s3 = inlined_call_operand.vmem [shape: f32[128,8], index: 3, kind: input, shape index: {}]
  %s4 = inlined_call_operand.vmem [shape: f32[1,128], index: 4, kind: input, shape index: {}]
  %s5 = inlined_call_operand.vmem [shape: f32[1,8], index: 5, kind: input, shape index: {}]
  %s6 = inlined_call_operand.vmem [shape: f32[8,8], index: 6, kind: input, shape index: {}]
  %s7 = inlined_call_operand.vmem [shape: f32[1,64], index: 7, kind: output, shape index: {}]
  %s8 = sld [smem:[#allocation0]]
  $region38: #{idprobnet_forward_batched.1} parent=0
    _
  %s10 = ssub.s32 1, %s8
  %s11 = scalar_select 0, %s10, %s8
  // Predicated region
  $region2: #{idprobnet_forward_batched.1} parent=0 // pred_check
    _
  $region3: #{idprobnet_forward_batched.1} parent=0 // pred_check_branch
    %13 = sbr.rel (0) target = $region5
  $region4: #{idprobnet_forward_batched.1} parent=0 // pred_region
    _
  $region5: #{idprobnet_forward_batched.1} parent=0 // pred_fallthru
    _
  // Predicated region
  $region6: #{idprobnet_forward_batched.1} parent=0 // pred_check
    _
  $region7: #{idprobnet_forward_batched.1} parent=0 // pred_check_branch
    %15 = sbr.rel (0) target = $region9
  $region8: #{idprobnet_forward_batched.1} parent=0 // pred_region
    _
  $region9: #{idprobnet_forward_batched.1} parent=0 // pred_fallthru
    _
  // Predicated region
  $region10: #{idprobnet_forward_batched.1} parent=0 // pred_check
    _
  $region11: #{idprobnet_forward_batched.1} parent=0 // pred_check_branch
    %17 = sbr.rel (0) target = $region13
  $region12: #{idprobnet_forward_batched.1} parent=0 // pred_region
    _
  $region13: #{idprobnet_forward_batched.1} parent=0 // pred_fallthru
    _
  // Predicated region
  $region14: #{idprobnet_forward_batched.1} parent=0 // pred_check
    _
  $region15: #{idprobnet_forward_batched.1} parent=0 // pred_check_branch
    %19 = sbr.rel (0) target = $region17
  $region16: #{idprobnet_forward_batched.1} parent=0 // pred_region
    _
  $region17: #{idprobnet_forward_batched.1} parent=0 // pred_fallthru
    _
  // Predicated region
  $region18: #{idprobnet_forward_batched.1} parent=0 // pred_check
    _
  $region19: #{idprobnet_forward_batched.1} parent=0 // pred_check_branch
    %21 = sbr.rel (0) target = $region21
  $region20: #{idprobnet_forward_batched.1} parent=0 // pred_region
    _
  $region21: #{idprobnet_forward_batched.1} parent=0 // pred_fallthru
    _
  // Predicated region
  $region22: #{idprobnet_forward_batched.1} parent=0 // pred_check
    _
  $region23: #{idprobnet_forward_batched.1} parent=0 // pred_check_branch
    %23 = sbr.rel (0) target = $region25
  $region24: #{idprobnet_forward_batched.1} parent=0 // pred_region
    _
  $region25: #{idprobnet_forward_batched.1} parent=0 // pred_fallthru
    _
  // Predicated region
  $region26: #{idprobnet_forward_batched.1} parent=0 // pred_check
    _
  $region27: #{idprobnet_forward_batched.1} parent=0 // pred_check_branch
    %25 = sbr.rel (0) target = $region29
  $region28: #{idprobnet_forward_batched.1} parent=0 // pred_region
    _
  $region29: #{idprobnet_forward_batched.1} parent=0 // pred_fallthru
    _
  %v26 = vld [vmem:[%s0] sm:$0xff]
  %v27 = vld [vmem:[%s1] sm:$0xff]
  %v28 = vld [vmem:[%s1 + $0x8] sm:$0xff]
  %v29 = vld [vmem:[%s1 + $0x10] sm:$0xff]
  %v30 = vld [vmem:[%s1 + $0x18] sm:$0xff]
  %v31 = vld [vmem:[%s1 + $0x20] sm:$0xff]
  %v32 = vld [vmem:[%s1 + $0x28] sm:$0xff]
  %v33 = vld [vmem:[%s1 + $0x30] sm:$0xff]
  %v34 = vld [vmem:[%s1 + $0x38] sm:$0xff]
  %v35 = vld [vmem:[%s1 + $0x40] sm:$0xff]
  %v36 = vld [vmem:[%s1 + $0x48] sm:$0xff]
  %v37 = vld [vmem:[%s1 + $0x50] sm:$0xff]
  %v38 = vld [vmem:[%s1 + $0x58] sm:$0xff]
  %v39 = vld [vmem:[%s1 + $0x60] sm:$0xff]
  %v40 = vld [vmem:[%s1 + $0x68] sm:$0xff]
  %v41 = vld [vmem:[%s1 + $0x70] sm:$0xff]
  %v42 = vld [vmem:[%s1 + $0x78] sm:$0xff]
  %43 = vmatpush.msra.mxu0 %v42
  %44 = vmatpush.msra.mxu0 %v41
  %45 = vmatpush.msra.mxu0 %v40
  %46 = vmatpush.msra.mxu0 %v39
  %47 = vmatpush.msra.mxu0 %v38
  %48 = vmatpush.msra.mxu0 %v37
  %49 = vmatpush.msra.mxu0 %v36
  %50 = vmatpush.msra.mxu0 %v35
  %51 = vmatpush.msra.mxu0 %v34
  %52 = vmatpush.msra.mxu0 %v33
  %53 = vmatpush.msra.mxu0 %v32
  %54 = vmatpush.msra.mxu0 %v31
  %55 = vmatpush.msra.mxu0 %v30
  %56 = vmatpush.msra.mxu0 %v29
  %57 = vmatpush.msra.mxu0 %v28
  %58 = vmatpush.msra.mxu0 %v27
  %59 = vmatmul.f32.gmra.mxu0 %v26
  %v60 = vpop.f32.mrf.mxu0
  %v61 = vadd.f32 0.0, %v60
  %62 = vdwg.mxu0
  %v63 = vmax.f32 %v61, 0.0
  %64 = vadd.xlane.f32.xlu0 %v63
  %v65 = vpop.xlane.xlu0 %64
  %v66 = vrot.slane %v65, 4
  %v67 = vadd.f32 %v65, %v66
  %v68 = vrot.slane %v67, 2
  %v69 = vadd.f32 %v67, %v68
  %v70 = vrot.slane %v69, 1
  %v71 = vadd.f32 %v69, %v70
  %v72 = vmul.f32 %v63, %v63
  %73 = vadd.xlane.f32.xlu0 %v72
  %v74 = vpop.xlane.xlu0 %73
  %v75 = vrot.slane %v74, 4
  %v76 = vadd.f32 %v74, %v75
  %v77 = vrot.slane %v76, 2
  %v78 = vadd.f32 %v76, %v77
  %v79 = vrot.slane %v78, 1
  %v80 = vadd.f32 %v78, %v79
  %v81 = vrcp.pop 1024.0
  %v82 = vmul.f32 1024.0, %v81
  %v83 = vsub.f32 1.0, %v82
  %v84 = vmul.f32 %v81, %v83
  %v85 = vadd.f32 %v81, %v84
  %vm86 = vweird.f32 %v81
  %v87 = vsel %vm86, %v81, %v85
  %v88 = vmul.f32 %v71, %v87
  %v89 = vmul.f32 %v71, %v71
  %v90 = vmul.f32 %v89, %v87
  %v91 = vsub.f32 %v80, %v90
  %v92 = vrcp.pop 1023.0
  %v93 = vmul.f32 1023.0, %v92
  %v94 = vsub.f32 1.0, %v93
  %v95 = vmul.f32 %v92, %v94
  %v96 = vadd.f32 %v92, %v95
  %vm97 = vweird.f32 %v92
  %v98 = vsel %vm97, %v92, %v96
  %v99 = vmul.f32 %v91, %v98
  %v100 = vrsqrt.pop %v99
  %v101 = vmul.f32 %v100, %v99
  %v102 = vmul.f32 %v101, %v100
  %v103 = vmul.f32 0.5, %v102
  %v104 = vsub.f32 1.5, %v103
  %v105 = vmul.f32 %v100, %v104
  %vm106 = vweird.f32 %v99
  %vm107 = vweird.f32 %v100
  %vm108 = vmor %vm106, %vm107
  %v109 = vsel %vm108, %v100, %v105
  %v110 = vld [vmem:[%s2] sm:$0xff]
  %v111 = vld [vmem:[%s2 + $0x8] sm:$0xff]
  %v112 = vld [vmem:[%s2 + $0x10] sm:$0xff]
  %v113 = vld [vmem:[%s2 + $0x18] sm:$0xff]
  %v114 = vld [vmem:[%s2 + $0x20] sm:$0xff]
  %v115 = vld [vmem:[%s2 + $0x28] sm:$0xff]
  %v116 = vld [vmem:[%s2 + $0x30] sm:$0xff]
  %v117 = vld [vmem:[%s2 + $0x38] sm:$0xff]
  %v118 = vld [vmem:[%s2 + $0x40] sm:$0xff]
  %v119 = vld [vmem:[%s2 + $0x48] sm:$0xff]
  %v120 = vld [vmem:[%s2 + $0x50] sm:$0xff]
  %v121 = vld [vmem:[%s2 + $0x58] sm:$0xff]
  %v122 = vld [vmem:[%s2 + $0x60] sm:$0xff]
  %v123 = vld [vmem:[%s2 + $0x68] sm:$0xff]
  %v124 = vld [vmem:[%s2 + $0x70] sm:$0xff]
  %v125 = vld [vmem:[%s2 + $0x78] sm:$0xff]
  %126 = vmatpush.msra.mxu0 %v125
  %127 = vmatpush.msra.mxu0 %v124
  %128 = vmatpush.msra.mxu0 %v123
  %129 = vmatpush.msra.mxu0 %v122
  %130 = vmatpush.msra.mxu0 %v121
  %131 = vmatpush.msra.mxu0 %v120
  %132 = vmatpush.msra.mxu0 %v119
  %133 = vmatpush.msra.mxu0 %v118
  %134 = vmatpush.msra.mxu0 %v117
  %135 = vmatpush.msra.mxu0 %v116
  %136 = vmatpush.msra.mxu0 %v115
  %137 = vmatpush.msra.mxu0 %v114
  %138 = vmatpush.msra.mxu0 %v113
  %139 = vmatpush.msra.mxu0 %v112
  %140 = vmatpush.msra.mxu0 %v111
  %141 = vmatpush.msra.mxu0 %v110
  %142 = vmatmul.f32.gmra.mxu0 %v63
  %v143 = vpop.f32.mrf.mxu0
  %v144 = vadd.f32 0.0, %v143
  %145 = vdwg.mxu0
  %v146 = vmul.f32 %v109, %v144
  %v147 = vmul.f32 %v88, %v109
  %v148 = vld [vmem:[%s4] sm:$0x1]
  %v149 = vmul.f32 %v147, %v148
  %v151 = vperm.slane %v149, 0
  %v153 = vsub.f32 %v146, %v151
  %v154 = vmax.f32 %v153, 0.0
  %155 = vadd.xlane.f32.xlu0 %v154
  %v156 = vpop.xlane.xlu0 %155
  %v157 = vrot.slane %v156, 4
  %v158 = vadd.f32 %v156, %v157
  %v159 = vrot.slane %v158, 2
  %v160 = vadd.f32 %v158, %v159
  %v161 = vrot.slane %v160, 1
  %v162 = vadd.f32 %v160, %v161
  %v163 = vmul.f32 %v154, %v154
  %164 = vadd.xlane.f32.xlu0 %v163
  %v165 = vpop.xlane.xlu0 %164
  %v166 = vrot.slane %v165, 4
  %v167 = vadd.f32 %v165, %v166
  %v168 = vrot.slane %v167, 2
  %v169 = vadd.f32 %v167, %v168
  %v170 = vrot.slane %v169, 1
  %v171 = vadd.f32 %v169, %v170
  %v172 = vmul.f32 %v162, %v87
  %v173 = vmul.f32 %v162, %v162
  %v174 = vmul.f32 %v173, %v87
  %v175 = vsub.f32 %v171, %v174
  %v176 = vmul.f32 %v175, %v98
  %v177 = vrsqrt.pop %v176
  %v178 = vmul.f32 %v177, %v176
  %v179 = vmul.f32 %v178, %v177
  %v180 = vmul.f32 0.5, %v179
  %v181 = vsub.f32 1.5, %v180
  %v182 = vmul.f32 %v177, %v181
  %vm183 = vweird.f32 %v176
  %vm184 = vweird.f32 %v177
  %vm185 = vmor %vm183, %vm184
  %v186 = vsel %vm185, %v177, %v182
  %v187 = vld [vmem:[%s3] sm:$0xff]
  %v188 = vld [vmem:[%s3 + $0x8] sm:$0xff]
  %v189 = vld [vmem:[%s3 + $0x10] sm:$0xff]
  %v190 = vld [vmem:[%s3 + $0x18] sm:$0xff]
  %v191 = vld [vmem:[%s3 + $0x20] sm:$0xff]
  %v192 = vld [vmem:[%s3 + $0x28] sm:$0xff]
  %v193 = vld [vmem:[%s3 + $0x30] sm:$0xff]
  %v194 = vld [vmem:[%s3 + $0x38] sm:$0xff]
  %v195 = vld [vmem:[%s3 + $0x40] sm:$0xff]
  %v196 = vld [vmem:[%s3 + $0x48] sm:$0xff]
  %v197 = vld [vmem:[%s3 + $0x50] sm:$0xff]
  %v198 = vld [vmem:[%s3 + $0x58] sm:$0xff]
  %v199 = vld [vmem:[%s3 + $0x60] sm:$0xff]
  %v200 = vld [vmem:[%s3 + $0x68] sm:$0xff]
  %v201 = vld [vmem:[%s3 + $0x70] sm:$0xff]
  %v202 = vld [vmem:[%s3 + $0x78] sm:$0xff]
  %203 = vmatpush.msra.mxu0 %v202
  %204 = vmatpush.msra.mxu0 %v201
  %205 = vmatpush.msra.mxu0 %v200
  %206 = vmatpush.msra.mxu0 %v199
  %207 = vmatpush.msra.mxu0 %v198
  %208 = vmatpush.msra.mxu0 %v197
  %209 = vmatpush.msra.mxu0 %v196
  %210 = vmatpush.msra.mxu0 %v195
  %211 = vmatpush.msra.mxu0 %v194
  %212 = vmatpush.msra.mxu0 %v193
  %213 = vmatpush.msra.mxu0 %v192
  %214 = vmatpush.msra.mxu0 %v191
  %215 = vmatpush.msra.mxu0 %v190
  %216 = vmatpush.msra.mxu0 %v189
  %217 = vmatpush.msra.mxu0 %v188
  %218 = vmatpush.msra.mxu0 %v187
  %219 = vmatmul.f32.gmra.mxu0 %v154
  %v220 = vpop.f32.mrf.mxu0
  %v221 = vadd.f32 0.0, %v220
  %222 = vdwg.mxu0
  %v223 = vmul.f32 %v186, %v221
  %v224 = vmul.f32 %v172, %v186
  %v225 = vld [vmem:[%s5] sm:$0x1]
  %v226 = vmul.f32 %v224, %v225
  %v228 = vperm.slane %v226, 0
  %v230 = vsub.f32 %v223, %v228
  %v231 = vld [vmem:[%s6] sm:$0xff]
  %v232 = vadd.f32 %v230, %v231
  %vm233 = vcmask 64512
  %v234 = vsel %vm233, %v232, -inf
  %v235 = vrot.slane %v234, 4
  %v236 = vmax.f32 %v234, %v235
  %v237 = vrot.slane %v236, 2
  %v238 = vmax.f32 %v236, %v237
  %v239 = vrot.slane %v238, 1
  %v240 = vmax.f32 %v238, %v239
  %v241 = vsub.f32 %v232, %v240
  %v242 = vmul.f32 %v241, 1.442695
  %v243 = vpow.pop %v242
  %v244 = vsel %vm233, %v243, 0.0
  %v245 = vrot.slane %v244, 4
  %v246 = vadd.f32 %v244, %v245
  %v247 = vrot.slane %v246, 2
  %v248 = vadd.f32 %v246, %v247
  %v249 = vrot.slane %v248, 1
  %v250 = vadd.f32 %v248, %v249
  %v251 = vrcp.pop %v250
  %v252 = vmul.f32 %v250, %v251
  %v253 = vsub.f32 1.0, %v252
  %v254 = vmul.f32 %v251, %v253
  %v255 = vadd.f32 %v251, %v254
  %vm256 = vweird.f32 %v250
  %vm257 = vweird.f32 %v251
  %vm258 = vmor %vm256, %vm257
  %v259 = vsel %vm258, %v251, %v255
  %v260 = vand.u32 2147483647, %v250
  %vm261 = vcmp.eq.f32.partialorder %v260, 8.507059e+37
  %v262 = vand.u32 %v250, 2147483648
  %v263 = vor.u32 1.1754944e-38, %v262
  %v264 = vsel %vm261, %v263, %v259
  %v265 = vmul.f32 %v243, %v264
  %v266 = vrot.slane %v265, 4
  %vm267 = vcmask 1047556
  %v268 = vsel %vm267, 0.0, %v266
  %v270 = vunpack.c.l.s4 1983009808
  %v271 = vunpack.c.0.s8 %v270
  %v272 = vperm.slane %v265, %v271
  %v274 = vunpack.c.l.s4 1983009808
  %v275 = vunpack.c.0.s8 %v274
  %v276 = vperm.slane %v268, %v275
  %v277 = vrot.slane %v272, 4
  %v278 = vsel %vm267, 0.0, %v277
  %v280 = vunpack.c.l.s4 1934713408
  %v281 = vunpack.c.0.s8 %v280
  %v282 = vperm.slane %v272, %v281
  %v284 = vunpack.c.l.s4 1934713408
  %v285 = vunpack.c.0.s8 %v284
  %v286 = vperm.slane %v278, %v285
  %v287 = vrot.slane %v276, 4
  %v288 = vsel %vm267, 0.0, %v287
  %v290 = vunpack.c.l.s4 1934713408
  %v291 = vunpack.c.0.s8 %v290
  %v292 = vperm.slane %v276, %v291
  %v294 = vunpack.c.l.s4 1934713408
  %v295 = vunpack.c.0.s8 %v294
  %v296 = vperm.slane %v288, %v295
  %v297 = vrot.slane %v282, 4
  %v298 = vsel %vm267, 0.0, %v297
  %v299 = vrot.slane %v286, 4
  %v300 = vsel %vm267, 0.0, %v299
  %v301 = vrot.slane %v292, 4
  %v302 = vsel %vm267, 0.0, %v301
  %v303 = vrot.slane %v296, 4
  %v304 = vsel %vm267, 0.0, %v303
  %306 = vrot.lane.b32.xlu0 %v298, 8
  %v307 = vpop.permute.xlu0 %306
  %310 = vrot.lane.b32.xlu0 %v286, 16
  %v311 = vpop.permute.xlu0 %310
  %314 = vrot.lane.b32.xlu0 %v300, 24
  %v315 = vpop.permute.xlu0 %314
  %318 = vrot.lane.b32.xlu0 %v292, 32
  %v319 = vpop.permute.xlu0 %318
  %322 = vrot.lane.b32.xlu0 %v302, 40
  %v323 = vpop.permute.xlu0 %322
  %326 = vrot.lane.b32.xlu0 %v296, 48
  %v327 = vpop.permute.xlu0 %326
  %330 = vrot.lane.b32.xlu0 %v304, 56
  %v331 = vpop.permute.xlu0 %330
  %v333 = vsel %vm233, %v282, %v307
  %vm334 = vcmask 130048
  %v335 = vsel %vm334, %v333, %v311
  %vm336 = vcmask 195584
  %v337 = vsel %vm336, %v335, %v315
  %vm338 = vcmask 261120
  %v339 = vsel %vm338, %v337, %v319
  %vm340 = vcmask 326656
  %v341 = vsel %vm340, %v339, %v323
  %vm342 = vcmask 392192
  %v343 = vsel %vm342, %v341, %v327
  %vm344 = vcmask 457728
  %v345 = vsel %vm344, %v343, %v331
  %vm346 = vcmask 516096
  %347 = vst.msk [vmem:[%s7] sm:$0x1] %vm346, %v345
  // Predicated region
  $region30: #{idprobnet_forward_batched.1} parent=0 // pred_check
    _
  $region31: #{idprobnet_forward_batched.1} parent=0 // pred_check_branch
    %349 = sbr.rel (0) target = $region33
  $region32: #{idprobnet_forward_batched.1} parent=0 // pred_region
    _
  $region33: #{idprobnet_forward_batched.1} parent=0 // pred_fallthru
    _
  // Predicated region
  $region34: #{idprobnet_forward_batched.1} parent=0 // pred_check
    _
  $region35: #{idprobnet_forward_batched.1} parent=0 // pred_check_branch
    %351 = sbr.rel (0) target = $region37
  $region36: #{idprobnet_forward_batched.1} parent=0 // pred_region
    _
  $region37: #{idprobnet_forward_batched.1} parent=0 // pred_fallthru
    _

</llo_original>
